<compile_context>
chip_gen: v7x
topology: tpu7x:2x2x1
jax: 0.10.0
libtpu: 0.0.40
codegen_flags: <defaults>
</compile_context>

<pallas_src>
import jax
import jax.numpy as jnp
from jax.experimental import pallas as pl
from jax.experimental.pallas import tpu as pltpu

# 48 MiB scoped VMEM: within v7x's 64 MiB physical per-TC budget (with headroom
# for double-buffering) and valid on v5e/v6e (128 MiB physical).
_VMEM_LIMIT_BYTES = 48 * 1024 * 1024


# ----------------------------------------------------------------------------
# Pallas kernels
# ----------------------------------------------------------------------------
def _conv_mm_relu_kernel(x_ref, w_ref, b_ref, o_ref, acc_ref):
    """One (tm, tn) tile of relu(patches @ W + b), accumulated over the K grid axis."""
    k = pl.program_id(2)

    @pl.when(k == 0)
    def _init():
        acc_ref[...] = jnp.zeros_like(acc_ref)

    acc_ref[...] += jnp.dot(x_ref[...], w_ref[...],
                            preferred_element_type=jnp.float32)

    @pl.when(k == pl.num_programs(2) - 1)
    def _finalize():
        o_ref[...] = jnp.maximum(acc_ref[...] + b_ref[...], 0.0).astype(o_ref.dtype)


def _pairmax_kernel(x_ref, o_ref):
    """o[m, c] = max(x[m, c], x[m, C + c]) — elementwise max of the two row halves."""
    v = x_ref[...]
    c = o_ref.shape[-1]
    o_ref[...] = jnp.maximum(v[:, :c], v[:, c:])


# ----------------------------------------------------------------------------
# Conv 3x3 + fused ReLU (tiled matmul)
# ----------------------------------------------------------------------------
def conv3x3_relu(x_nhwc, w_oihw, b):
    """3x3 conv, stride 1, padding 1, fused bias+ReLU.  x_nhwc: (N,H,W,Cin) bf16."""
    N, H, W, Cin = x_nhwc.shape
    Cout = w_oihw.shape[0]
    K = 9 * Cin
    M = N * H * W

    # im2col in bf16 (layout glue): patch order is (dy, dx, cin) -> K = 9*Cin.
    # TODO(synk): stream the 9 conv taps straight from the padded NHWC input
    # (manual DMA / per-tap K tiling) instead of materializing im2col in HBM.
    x_bf = x_nhwc.astype(jnp.bfloat16)
    xp = jnp.pad(x_bf, ((0, 0), (1, 1), (1, 1), (0, 0)))
    cols = [xp[:, dy:dy + H, dx:dx + W, :] for dy in range(3) for dx in range(3)]
    patches = jnp.concatenate(cols, axis=-1).reshape(M, K)

    # weight (Cout,Cin,3,3) -> (3,3,Cin,Cout) -> (9*Cin, Cout), matching patch order.
    wmat = jnp.transpose(w_oihw, (2, 3, 1, 0)).reshape(K, Cout).astype(jnp.bfloat16)
    bmat = b.reshape(1, Cout).astype(jnp.float32)

    # Tile sizes: lane-dense (multiples of 128 or full-dim), sublane-aligned,
    # and K tiles always divide K exactly (required for safe accumulation).
    tm = M if M <= 256 else 256
    tn = Cout if Cout <= 256 else 256
    tk = K if K <= 1152 else (1152 if K % 1152 == 0 else K)

    grid = (pl.cdiv(M, tm), pl.cdiv(Cout, tn), pl.cdiv(K, tk))

    out = pl.pallas_call(
        _conv_mm_relu_kernel,
        out_shape=jax.ShapeDtypeStruct((M, Cout), jnp.bfloat16),
        grid_spec=pltpu.PrefetchScalarGridSpec(
            num_scalar_prefetch=0,
            grid=grid,
            in_specs=[
                pl.BlockSpec((tm, tk), lambda i, j, k: (i, k)),   # patches tile
                pl.BlockSpec((tk, tn), lambda i, j, k: (k, j)),   # weight tile
                pl.BlockSpec((1, tn), lambda i, j, k: (0, j)),    # bias tile
            ],
            out_specs=pl.BlockSpec((tm, tn), lambda i, j, k: (i, j)),
            scratch_shapes=[pltpu.VMEM((tm, tn), jnp.float32)],
        ),
        compiler_params=pltpu.CompilerParams(
            dimension_semantics=("parallel", "parallel", "arbitrary"),
            vmem_limit_bytes=_VMEM_LIMIT_BYTES,
        ),
    )(patches, wmat, bmat)

    return out.reshape(N, H, W, Cout)


# ----------------------------------------------------------------------------
# 2x2 / stride-2 max-pool (two tiled "pair max" passes, no transpose glue)
# ----------------------------------------------------------------------------
def _pairmax_rows(x2d):
    """x2d: (M, 2*C) -> (M, C), per-row max of left/right halves (tiled over rows)."""
    M, twoC = x2d.shape
    C = twoC // 2

    tb = M if M <= 512 else 512
    # keep the input block under ~4 MiB so the default scoped VMEM always suffices
    max_rows = max(8, (4 * 1024 * 1024) // (twoC * x2d.dtype.itemsize))
    tb = min(tb, max_rows)
    if tb < M:
        tb = max(8, (tb // 8) * 8)   # sublane-aligned when not full-dim

    grid = (pl.cdiv(M, tb),)
    return pl.pallas_call(
        _pairmax_kernel,
        out_shape=jax.ShapeDtypeStruct((M, C), x2d.dtype),
        grid_spec=pltpu.PrefetchScalarGridSpec(
            num_scalar_prefetch=0,
            grid=grid,
            in_specs=[pl.BlockSpec((tb, twoC), lambda i: (i, 0))],
            out_specs=pl.BlockSpec((tb, C), lambda i: (i, 0)),
        ),
        compiler_params=pltpu.CompilerParams(
            dimension_semantics=("parallel",),
            vmem_limit_bytes=_VMEM_LIMIT_BYTES,
        ),
    )(x2d)


def maxpool2x2(x_nhwc):
    """2x2 max pool, stride 2.  x_nhwc: (N,H,W,C) with H,W even."""
    N, H, W, C = x_nhwc.shape
    Ho, Wo = H // 2, W // 2
    # pass 1: max over horizontal (W) pairs — free row-major reshape, no transpose
    xw = _pairmax_rows(x_nhwc.reshape(N * H * Wo, 2 * C))        # (N*H*Wo, C)
    # pass 2: max over vertical (H) pairs — free row-major reshape, no transpose
    xhw = _pairmax_rows(xw.reshape(N * Ho, 2 * Wo * C))          # (N*Ho, Wo*C)
    return xhw.reshape(N, Ho, Wo, C)
    # TODO(synk): fuse the pool into the preceding conv epilogue to drop one
    # full activation round-trip per pool layer.


# ----------------------------------------------------------------------------
# VGG19 "features" construction (deterministic synthetic weights)
# ----------------------------------------------------------------------------
_VGG19_CFG = [64, 64, 'M', 128, 128, 'M', 256, 256, 256, 256, 'M',
              512, 512, 512, 512, 'M', 512, 512, 512, 512, 'M']


def init_vgg19_features(key):
    """Returns a layer list mirroring torchvision vgg19().features indexing."""
    layers = []
    cin = 3
    for v in _VGG19_CFG:
        if v == 'M':
            layers.append(('pool', None))
        else:
            key, kw, kb = jax.random.split(key, 3)
            fan_in = cin * 9
            w = jax.random.normal(kw, (v, cin, 3, 3), jnp.float32) * jnp.sqrt(2.0 / fan_in)
            b = jax.random.normal(kb, (v,), jnp.float32) * 0.01
            layers.append(('conv', (w, b)))
            layers.append(('relu', None))
            cin = v
    return layers


def vgg19_forward(x_nchw, layers, indices=None):
    """Mirrors Vgg19.forward: apply features[0:indices[-1]], collect at indices."""
    if indices is None:
        indices = [2, 7, 12, 21, 30]
    # layout: NCHW in (PyTorch) -> NHWC bf16 inside -> NCHW f32 out at each tap.
    x = jnp.transpose(x_nchw, (0, 2, 3, 1)).astype(jnp.bfloat16)
    outs = []
    for i in range(indices[-1]):
        kind, p = layers[i]
        if kind == 'conv':
            x = conv3x3_relu(x, *p)      # ReLU of layer i+1 fused here
        elif kind == 'relu':
            pass                         # already applied (fused into conv kernel)
        else:                            # 'pool'
            x = maxpool2x2(x)
        if i + 1 in indices:
            outs.append(jnp.transpose(x, (0, 3, 1, 2)).astype(jnp.float32))
    return outs


if __name__ == "__main__":
    key = jax.random.PRNGKey(0)
    kx, kp = jax.random.split(key)
    # small input consistent with the module: batch=2, 3 channels, 16x16 spatial
    x = jax.random.normal(kx, (2, 3, 16, 16), jnp.float32)
    layers = init_vgg19_features(kp)

    feats = vgg19_forward(x, layers)
    for f in feats:
        jax.block_until_ready(f)

    expected = [(2, 64, 16, 16), (2, 128, 8, 8), (2, 256, 4, 4),
                (2, 512, 2, 2), (2, 512, 1, 1)]
    assert [tuple(f.shape) for f in feats] == expected, [f.shape for f in feats]
    assert all(bool(jnp.all(jnp.isfinite(f))) for f in feats)
    print("KERNEL_OK")
</pallas_src>

<mosaic_0001>
module attributes {stable_mosaic.version = 11 : i64} {
  func.func @_conv_mm_relu_kernel(%arg0: i32, %arg1: i32, %arg2: i32, %arg3: memref<256x27xbf16, #tpu.memory_space<vmem>>, %arg4: memref<27x64xbf16, #tpu.memory_space<vmem>>, %arg5: memref<1x64xf32, #tpu.memory_space<vmem>>, %arg6: memref<256x64xbf16, #tpu.memory_space<vmem>>, %arg7: memref<256x64xf32, #tpu.memory_space<vmem>>) attributes {dimension_semantics = [#tpu.dimension_semantics<parallel>, #tpu.dimension_semantics<parallel>, #tpu.dimension_semantics<arbitrary>], iteration_bounds = array<i64: 2, 1, 1>, scalar_prefetch = 0 : i64, scratch_operands = 1 : i64, tpu.core_type = #tpu.core_type<tc>, window_params = [{transform_indices = @transform_0, window_bounds = array<i64: 256, 27>}, {transform_indices = @transform_1, window_bounds = array<i64: 27, 64>}, {transform_indices = @transform_2, window_bounds = array<i64: 1, 64>}, {transform_indices = @transform_3, window_bounds = array<i64: 256, 64>}]} {
    %c0_i32 = arith.constant 0 : i32
    %0 = arith.cmpi eq, %arg2, %c0_i32 : i32
    %1 = arith.extui %0 : i1 to i32
    %c0_i32_0 = arith.constant 0 : i32
    %2 = arith.cmpi ne, %1, %c0_i32_0 : i32
    scf.if %2 {
      %cst_10 = arith.constant 0.000000e+00 : f32
      %12 = vector.broadcast %cst_10 : f32 to vector<256x64xf32>
      %c0_11 = arith.constant 0 : index
      %c0_12 = arith.constant 0 : index
      %13 = vector.load %arg7[%c0_11, %c0_12] : memref<256x64xf32, #tpu.memory_space<vmem>>, vector<256x64xf32>
      tpu.vector_store %arg7[%c0_11, %c0_12], %12 {strides = array<i32>} : memref<256x64xf32, #tpu.memory_space<vmem>>, vector<256x64xf32>,
    } else {
    }
    %c0 = arith.constant 0 : index
    %c0_1 = arith.constant 0 : index
    %3 = vector.load %arg7[%c0, %c0_1] : memref<256x64xf32, #tpu.memory_space<vmem>>, vector<256x64xf32>
    %c0_2 = arith.constant 0 : index
    %c0_3 = arith.constant 0 : index
    %4 = vector.load %arg3[%c0_2, %c0_3] : memref<256x27xbf16, #tpu.memory_space<vmem>>, vector<256x27xbf16>
    %c0_4 = arith.constant 0 : index
    %c0_5 = arith.constant 0 : index
    %5 = vector.load %arg4[%c0_4, %c0_5] : memref<27x64xbf16, #tpu.memory_space<vmem>>, vector<27x64xbf16>
    %cst = arith.constant dense<0.000000e+00> : vector<256x64xf32>
    %6 = tpu.matmul %4, %5, %cst {dimension_numbers = #tpu.dot_dimension_numbers<[1], [0], [0], [1], [0, 0, 1, 1], [], []>} : vector<256x27xbf16>, vector<27x64xbf16>, vector<256x64xf32> -> vector<256x64xf32>
    %7 = arith.addf %3, %6 : vector<256x64xf32>
    %c0_6 = arith.constant 0 : index
    %c0_7 = arith.constant 0 : index
    %8 = vector.load %arg7[%c0_6, %c0_7] : memref<256x64xf32, #tpu.memory_space<vmem>>, vector<256x64xf32>
    tpu.vector_store %arg7[%c0_6, %c0_7], %7 {strides = array<i32>} : memref<256x64xf32, #tpu.memory_space<vmem>>, vector<256x64xf32>,
    %c0_i32_8 = arith.constant 0 : i32
    %9 = arith.cmpi eq, %arg2, %c0_i32_8 : i32
    %10 = arith.extui %9 : i1 to i32
    %c0_i32_9 = arith.constant 0 : i32
    %11 = arith.cmpi ne, %10, %c0_i32_9 : i32
    scf.if %11 {
      %c0_10 = arith.constant 0 : index
      %c0_11 = arith.constant 0 : index
      %12 = vector.load %arg7[%c0_10, %c0_11] : memref<256x64xf32, #tpu.memory_space<vmem>>, vector<256x64xf32>
      %c0_12 = arith.constant 0 : index
      %c0_13 = arith.constant 0 : index
      %13 = vector.load %arg5[%c0_12, %c0_13] : memref<1x64xf32, #tpu.memory_space<vmem>>, vector<1x64xf32>
      %14 = vector.broadcast %13 : vector<1x64xf32> to vector<256x64xf32>
      %15 = arith.addf %12, %14 : vector<256x64xf32>
      %cst_14 = arith.constant 0.000000e+00 : f32
      %16 = vector.broadcast %cst_14 : f32 to vector<256x64xf32>
      %17 = arith.maximumf %15, %16 : vector<256x64xf32>
      %18 = arith.truncf %17 : vector<256x64xf32> to vector<256x64xbf16>
      %c0_15 = arith.constant 0 : index
      %c0_16 = arith.constant 0 : index
      %19 = vector.load %arg6[%c0_15, %c0_16] : memref<256x64xbf16, #tpu.memory_space<vmem>>, vector<256x64xbf16>
      tpu.vector_store %arg6[%c0_15, %c0_16], %18 {strides = array<i32>} : memref<256x64xbf16, #tpu.memory_space<vmem>>, vector<256x64xbf16>,
    } else {
    }
    return
  }
  func.func @transform_0(%arg0: i32, %arg1: i32, %arg2: i32) -> (i32, i32) {
    %c0_i32 = arith.constant 0 : i32
    return %arg0, %arg2 : i32, i32
  }
  func.func @transform_1(%arg0: i32, %arg1: i32, %arg2: i32) -> (i32, i32) {
    %c0_i32 = arith.constant 0 : i32
    return %arg2, %arg1 : i32, i32
  }
  func.func @transform_2(%arg0: i32, %arg1: i32, %arg2: i32) -> (i32, i32) {
    %c0_i32 = arith.constant 0 : i32
    %c0_i32_0 = arith.constant 0 : i32
    return %c0_i32, %arg1 : i32, i32
  }
  func.func @transform_3(%arg0: i32, %arg1: i32, %arg2: i32) -> (i32, i32) {
    %c0_i32 = arith.constant 0 : i32
    return %arg0, %arg1 : i32, i32
  }
}

</mosaic_0001>

<llo_original>
// kernel: tpu_custom_call.1
$region0: #{tpu_custom_call.1}
  #allocation0 [shape = 'u32[]', space=smem, size = 0x4, offset = 0x4, fixed_abs, tag = 'smem constant byte address 0x4 - core index']
  #allocation1 [shape = 'u32[144,128]{1,0:T(1,128)}', space=vmem, size = 0x12000, scoped, tag = 'internal scratch']
  #allocation2 [shape = 'f32[256,64]{1,0:T(8,128)}', space=vmem, size = 0x20000, scoped, tag = 'scratch operand']
  %s0 = inlined_call_operand.vmem [shape: bf16[512,27], index: 0, kind: input, shape index: {}]
  %s1 = inlined_call_operand.vmem [shape: bf16[27,64], index: 1, kind: input, shape index: {}]
  %s2 = inlined_call_operand.vmem [shape: f32[1,64], index: 2, kind: input, shape index: {}]
  %s3 = inlined_call_operand.vmem [shape: bf16[512,64], index: 3, kind: output, shape index: {}]
  %s4 = sld [smem:[#allocation0]]
  $region53: #{tpu_custom_call.1} parent=0
    _
  %s6 = ssub.s32 1, %s4
  %s7 = scalar_select 0, %s6, %s4
  loop: start=0, step=1, limit=4
  $region2: #{tpu_custom_call.1} parent=0 // loop_pre_header
    _
  $region3: #{tpu_custom_call.1} parent=0 // loop_header
    %s9 = sphi 0, %s13
    %p10 = scmp.ge.s32.totalorder %s9, 4
    %s16 = sphi 0, %s35
    %s17 = sphi 0, %s31
    %s18 = sphi 0, %s27
    %s19 = sphi 0, %s16
    %s20 = sphi 0, %s17
    %s21 = sphi 0, %s18
    %s22 = sphi 0, %s19
    %s23 = sphi 0, %s20
    %s24 = sphi 0, %s21
    %s40 = sphi 0, %s42
    %s43 = sphi 0, %s40
    %s44 = sphi 0, %s43
    %s60 = sphi 0, %s44
    %s68 = sphi 0, %s70
    %s71 = sphi 0, %s68
    %s72 = sphi 0, %s71
    %s88 = sphi 0, %s72
    %s94 = sphi 0, %s96
    %s97 = sphi 0, %s94
    %s98 = sphi 0, %s97
    %s114 = sphi 0, %s98
    %s122 = sphi 0, %s124
    %s125 = sphi 0, %s122
    %s126 = sphi 0, %s125
    %s142 = sphi 0, %s126
  $region4: #{tpu_custom_call.1} parent=0 // loop_header_branch
    %12 = sbr.rel (%p10) target = $region8
  $region5: #{tpu_custom_call.1} parent=0 // loop_body
    %s14 = ssub.s32 %s9, 1
    %s15 = ssub.s32 %s9, 2
    %s25 = sadd.s32 1, %s18
    %p26 = scmp.ge.s32.totalorder %s25, 1
    %s27 = scalar_select %p26, 0, %s25
    %s28 = sadd.s32 1, %s17
    %s29 = scalar_select %p26, %s28, %s17
    %p30 = scmp.ge.s32.totalorder %s29, 1
    %s31 = scalar_select %p30, 0, %s29
    %s32 = sadd.s32 1, %s16
    %s33 = scalar_select %p30, %s32, %s16
    %p34 = scmp.ge.s32.totalorder %s33, 2
    %s35 = scalar_select %p34, 0, %s33
    %s36 = ssub.s32 %s16, %s35
    %s37 = ssub.s32 %s18, %s27
    %s38 = sor.u32 %s36, %s37
    %p39 = scmp.eq.s32.totalorder %s38, 0
    %s41 = sadd.s32 %s40, 1
    %s42 = scalar_select %p39, %s40, %s41
    %p45 = pneg %p39
    %p46 = scmp.eq.s32.totalorder %s9, 1
    %p47 = por %p45, %p46
    %p48 = scmp.ne.s32.totalorder %s40, %s43
    %p49 = scmp.eq.s32.totalorder %s9, 0
    %p50 = por %p48, %p49
    %p51 = scmp.ne.s32.totalorder %s40, %s43
    %p52 = scmp.eq.s32.totalorder %s14, 1
    %p53 = por %p51, %p52
    %p54 = scmp.ne.s32.totalorder %s43, %s44
    %p55 = scmp.eq.s32.totalorder %s14, 0
    %p56 = por %p54, %p55
    %p57 = scmp.ne.s32.totalorder %s43, %s44
    %p58 = scmp.eq.s32.totalorder %s15, 1
    %p59 = por %p57, %p58
    %p61 = scmp.ne.s32.totalorder %s44, %s60
    %p62 = scmp.eq.s32.totalorder %s15, 0
    %p63 = por %p61, %p62
    %s64 = ssub.s32 %s18, %s27
    %s65 = ssub.s32 %s17, %s31
    %s66 = sor.u32 %s64, %s65
    %p67 = scmp.eq.s32.totalorder %s66, 0
    %s69 = sadd.s32 %s68, 1
    %s70 = scalar_select %p67, %s68, %s69
    %p73 = pneg %p67
    %p74 = scmp.eq.s32.totalorder %s9, 1
    %p75 = por %p73, %p74
    %p76 = scmp.ne.s32.totalorder %s68, %s71
    %p77 = scmp.eq.s32.totalorder %s9, 0
    %p78 = por %p76, %p77
    %p79 = scmp.ne.s32.totalorder %s68, %s71
    %p80 = scmp.eq.s32.totalorder %s14, 1
    %p81 = por %p79, %p80
    %p82 = scmp.ne.s32.totalorder %s71, %s72
    %p83 = scmp.eq.s32.totalorder %s14, 0
    %p84 = por %p82, %p83
    %p85 = scmp.ne.s32.totalorder %s71, %s72
    %p86 = scmp.eq.s32.totalorder %s15, 1
    %p87 = por %p85, %p86
    %p89 = scmp.ne.s32.totalorder %s72, %s88
    %p90 = scmp.eq.s32.totalorder %s15, 0
    %p91 = por %p89, %p90
    %s92 = ssub.s32 %s17, %s31
    %p93 = scmp.eq.s32.totalorder %s92, 0
    %s95 = sadd.s32 %s94, 1
    %s96 = scalar_select %p93, %s94, %s95
    %p99 = pneg %p93
    %p100 = scmp.eq.s32.totalorder %s9, 1
    %p101 = por %p99, %p100
    %p102 = scmp.ne.s32.totalorder %s94, %s97
    %p103 = scmp.eq.s32.totalorder %s9, 0
    %p104 = por %p102, %p103
    %p105 = scmp.ne.s32.totalorder %s94, %s97
    %p106 = scmp.eq.s32.totalorder %s14, 1
    %p107 = por %p105, %p106
    %p108 = scmp.ne.s32.totalorder %s97, %s98
    %p109 = scmp.eq.s32.totalorder %s14, 0
    %p110 = por %p108, %p109
    %p111 = scmp.ne.s32.totalorder %s97, %s98
    %p112 = scmp.eq.s32.totalorder %s15, 1
    %p113 = por %p111, %p112
    %p115 = scmp.ne.s32.totalorder %s98, %s114
    %p116 = scmp.eq.s32.totalorder %s15, 0
    %p117 = por %p115, %p116
    %s118 = ssub.s32 %s16, %s35
    %s119 = ssub.s32 %s17, %s31
    %s120 = sor.u32 %s118, %s119
    %p121 = scmp.eq.s32.totalorder %s120, 0
    %s123 = sadd.s32 %s122, 1
    %s124 = scalar_select %p121, %s122, %s123
    %p127 = pneg %p121
    %p128 = scmp.eq.s32.totalorder %s9, 1
    %p129 = por %p127, %p128
    %p130 = scmp.ne.s32.totalorder %s122, %s125
    %p131 = scmp.eq.s32.totalorder %s9, 0
    %p132 = por %p130, %p131
    %p133 = scmp.ne.s32.totalorder %s122, %s125
    %p134 = scmp.eq.s32.totalorder %s14, 1
    %p135 = por %p133, %p134
    %p136 = scmp.ne.s32.totalorder %s125, %s126
    %p137 = scmp.eq.s32.totalorder %s14, 0
    %p138 = por %p136, %p137
    %p139 = scmp.ne.s32.totalorder %s125, %s126
    %p140 = scmp.eq.s32.totalorder %s15, 1
    %p141 = por %p139, %p140
    %p143 = scmp.ne.s32.totalorder %s126, %s142
    %p144 = scmp.eq.s32.totalorder %s15, 0
    %p145 = por %p143, %p144
    %p146 = scmp.le.s32.totalorder 1, %s9
    %p147 = scmp.lt.s32.totalorder %s9, 3
    %p148 = pnand %p146, %p147
    %p149 = pneg %p148
    // Predicated region
    $region9: #{tpu_custom_call.1} parent=5 // pred_check
      _
    $region10: #{tpu_custom_call.1} parent=5 // pred_check_branch
      %151 = sbr.rel (%p148) target = $region12
    $region11: #{tpu_custom_call.1} parent=5 // pred_region
      %s152 = ssub.s32 %s9, 1
      // Predicated region
      $region13: #{tpu_custom_call.1} parent=11 // pred_check
        %p153 = pneg %p84
      $region14: #{tpu_custom_call.1} parent=11 // pred_check_branch
        %155 = sbr.rel (%p153) target = $region16
      $region15: #{tpu_custom_call.1} parent=11 // pred_region
        %s156 = smul.u32 4, %s21
        %p157 = scmp.lt.s32.totalorder %s156, 3
        %s158 = scalar_select %p157, %s156, 3
        %p159 = scmp.lt.s32.totalorder %s20, 0
        %s160 = scalar_select %p159, %s20, 0
        %s161 = sadd.s32 %s160, %s158
        %s162 = smul.addr %s161, 4
        %s163 = scalar_lea.vmem %s1, %s162
        %s164 = smul.u32 4, %s21
      $region16: #{tpu_custom_call.1} parent=11 // pred_fallthru
        _
      // Predicated region
      $region17: #{tpu_custom_call.1} parent=11 // pred_check
        %p165 = pneg %p110
      $region18: #{tpu_custom_call.1} parent=11 // pred_check_branch
        %167 = sbr.rel (%p165) target = $region20
      $region19: #{tpu_custom_call.1} parent=11 // pred_region
        %p168 = scmp.lt.s32.totalorder %s20, 0
        %s169 = scalar_select %p168, %s20, 0
        %s170 = scalar_lea.vmem %s2, %s169
      $region20: #{tpu_custom_call.1} parent=11 // pred_fallthru
        _
    $region12: #{tpu_custom_call.1} parent=5 // pred_fallthru
      _
    %p171 = scmp.lt.s32.totalorder %s9, 2
    // Predicated region
    $region21: #{tpu_custom_call.1} parent=5 // pred_check
      %p172 = pneg %p171
    $region22: #{tpu_custom_call.1} parent=5 // pred_check_branch
      %174 = sbr.rel (%p172) target = $region24
    $region23: #{tpu_custom_call.1} parent=5 // pred_region
      // Predicated region
      $region25: #{tpu_custom_call.1} parent=23 // pred_check
        %p175 = pneg %p50
      $region26: #{tpu_custom_call.1} parent=23 // pred_check_branch
        %177 = sbr.rel (%p175) target = $region28
      $region27: #{tpu_custom_call.1} parent=23 // pred_region
        %s178 = smul.u32 32, %s16
        %p179 = scmp.lt.s32.totalorder %s178, 63
        %s180 = scalar_select %p179, %s178, 63
        %p181 = scmp.lt.s32.totalorder %s18, 0
        %s182 = scalar_select %p181, %s18, 0
        %s183 = sadd.s32 %s182, %s180
        %s184 = smul.addr %s183, 4
        %s185 = scalar_lea.vmem %s0, %s184
        %s186 = smul.u32 32, %s16
      $region28: #{tpu_custom_call.1} parent=23 // pred_fallthru
        _
    $region24: #{tpu_custom_call.1} parent=5 // pred_fallthru
      _
    %p187 = scmp.le.s32.totalorder 1, %s9
    %p188 = scmp.lt.s32.totalorder %s9, 3
    %p189 = pnand %p187, %p188
    %p190 = pneg %p189
    // Predicated region
    $region29: #{tpu_custom_call.1} parent=5 // pred_check
      _
    $region30: #{tpu_custom_call.1} parent=5 // pred_check_branch
      %192 = sbr.rel (%p189) target = $region32
    $region31: #{tpu_custom_call.1} parent=5 // pred_region
      %s193 = ssub.s32 %s9, 1
      %s194 = smul.u32 32, %s19
      %p195 = scmp.lt.s32.totalorder %s194, 63
      %s196 = scalar_select %p195, %s194, 63
      %p197 = scmp.lt.s32.totalorder %s21, 0
      %s198 = scalar_select %p197, %s21, 0
      %s199 = sadd.s32 %s198, %s196
      %s200 = smul.addr %s199, 4
      %s201 = scalar_lea.vmem %s0, %s200
      %p202 = pneg %p56
      %p203 = pneg %p53
      %s204 = smul.u32 4, %s21
      %p205 = scmp.lt.s32.totalorder %s204, 3
      %s206 = scalar_select %p205, %s204, 3
      %p207 = scmp.lt.s32.totalorder %s20, 0
      %s208 = scalar_select %p207, %s20, 0
      %s209 = sadd.s32 %s208, %s206
      %s210 = smul.addr %s209, 4
      %s211 = scalar_lea.vmem %s1, %s210
      %p212 = pneg %p84
      %p213 = pneg %p81
      %p214 = scmp.lt.s32.totalorder %s20, 0
      %s215 = scalar_select %p214, %s20, 0
      %s216 = scalar_lea.vmem %s2, %s215
      %p217 = pneg %p110
      %p218 = pneg %p107
      %p219 = pneg %p138
      %p220 = pneg %p135
      %s221 = smul.u32 32, %s19
      %p222 = scmp.lt.s32.totalorder %s221, 63
      %s223 = scalar_select %p222, %s221, 63
      %p224 = scmp.lt.s32.totalorder %s20, 0
      %s225 = scalar_select %p224, %s20, 0
      %s226 = sadd.s32 %s225, %s223
      %s227 = smul.addr %s226, 4
      %s228 = scalar_lea.vmem %s3, %s227
      %s229 = smul.u32 32, %s19
      %p230 = scmp.lt.s32.totalorder %s229, 63
      %s231 = scalar_select %p230, %s229, 63
      %p232 = scmp.lt.s32.totalorder %s21, 0
      %s233 = scalar_select %p232, %s21, 0
      %s234 = sadd.s32 %s233, %s231
      %s235 = smul.addr %s234, 4
      %s236 = scalar_lea.vmem %s0, %s235
      %s237 = smul.u32 32, %s19
      %s238 = smul.u32 4, %s21
      %p239 = scmp.lt.s32.totalorder %s238, 3
      %s240 = scalar_select %p239, %s238, 3
      %p241 = scmp.lt.s32.totalorder %s20, 0
      %s242 = scalar_select %p241, %s20, 0
      %s243 = sadd.s32 %s242, %s240
      %s244 = smul.addr %s243, 4
      %s245 = scalar_lea.vmem %s1, %s244
      %s246 = smul.u32 4, %s21
      %p247 = scmp.lt.s32.totalorder %s20, 0
      %s248 = scalar_select %p247, %s20, 0
      %s249 = scalar_lea.vmem %s2, %s248
      %s250 = smul.u32 32, %s19
      %p251 = scmp.lt.s32.totalorder %s250, 63
      %s252 = scalar_select %p251, %s250, 63
      %p253 = scmp.lt.s32.totalorder %s20, 0
      %s254 = scalar_select %p253, %s20, 0
      %s255 = sadd.s32 %s254, %s252
      %s256 = smul.addr %s255, 4
      %s257 = scalar_lea.vmem %s3, %s256
      %s258 = smul.u32 32, %s19
      %p260 = scmp.eq.s32.totalorder %s21, 0
      // Predicated region
      $region33: #{tpu_custom_call.1} parent=31 // pred_check
        %p261 = pneg %p260
      $region34: #{tpu_custom_call.1} parent=31 // pred_check_branch
        %263 = sbr.rel (%p261) target = $region36
      $region35: #{tpu_custom_call.1} parent=31 // pred_region
        %vm264 = vcmask 523264
        %265 = vst.msk [vmem:[#allocation2] sm:$0xff] %vm264, 0.0
        %266 = vst.msk [vmem:[#allocation2 + $0x8] sm:$0xff] %vm264, 0.0
        %267 = vst.msk [vmem:[#allocation2 + $0x10] sm:$0xff] %vm264, 0.0
        %268 = vst.msk [vmem:[#allocation2 + $0x18] sm:$0xff] %vm264, 0.0
        %269 = vst.msk [vmem:[#allocation2 + $0x20] sm:$0xff] %vm264, 0.0
        %270 = vst.msk [vmem:[#allocation2 + $0x28] sm:$0xff] %vm264, 0.0
        %271 = vst.msk [vmem:[#allocation2 + $0x30] sm:$0xff] %vm264, 0.0
        %272 = vst.msk [vmem:[#allocation2 + $0x38] sm:$0xff] %vm264, 0.0
        %273 = vst.msk [vmem:[#allocation2 + $0x40] sm:$0xff] %vm264, 0.0
        %274 = vst.msk [vmem:[#allocation2 + $0x48] sm:$0xff] %vm264, 0.0
        %275 = vst.msk [vmem:[#allocation2 + $0x50] sm:$0xff] %vm264, 0.0
        %276 = vst.msk [vmem:[#allocation2 + $0x58] sm:$0xff] %vm264, 0.0
        %277 = vst.msk [vmem:[#allocation2 + $0x60] sm:$0xff] %vm264, 0.0
        %278 = vst.msk [vmem:[#allocation2 + $0x68] sm:$0xff] %vm264, 0.0
        %279 = vst.msk [vmem:[#allocation2 + $0x70] sm:$0xff] %vm264, 0.0
        %280 = vst.msk [vmem:[#allocation2 + $0x78] sm:$0xff] %vm264, 0.0
        %281 = vst.msk [vmem:[#allocation2 + $0x80] sm:$0xff] %vm264, 0.0
        %282 = vst.msk [vmem:[#allocation2 + $0x88] sm:$0xff] %vm264, 0.0
        %283 = vst.msk [vmem:[#allocation2 + $0x90] sm:$0xff] %vm264, 0.0
        %284 = vst.msk [vmem:[#allocation2 + $0x98] sm:$0xff] %vm264, 0.0
        %285 = vst.msk [vmem:[#allocation2 + $0xa0] sm:$0xff] %vm264, 0.0
        %286 = vst.msk [vmem:[#allocation2 + $0xa8] sm:$0xff] %vm264, 0.0
        %287 = vst.msk [vmem:[#allocation2 + $0xb0] sm:$0xff] %vm264, 0.0
        %288 = vst.msk [vmem:[#allocation2 + $0xb8] sm:$0xff] %vm264, 0.0
        %289 = vst.msk [vmem:[#allocation2 + $0xc0] sm:$0xff] %vm264, 0.0
        %290 = vst.msk [vmem:[#allocation2 + $0xc8] sm:$0xff] %vm264, 0.0
        %291 = vst.msk [vmem:[#allocation2 + $0xd0] sm:$0xff] %vm264, 0.0
        %292 = vst.msk [vmem:[#allocation2 + $0xd8] sm:$0xff] %vm264, 0.0
        %293 = vst.msk [vmem:[#allocation2 + $0xe0] sm:$0xff] %vm264, 0.0
        %294 = vst.msk [vmem:[#allocation2 + $0xe8] sm:$0xff] %vm264, 0.0
        %295 = vst.msk [vmem:[#allocation2 + $0xf0] sm:$0xff] %vm264, 0.0
        %296 = vst.msk [vmem:[#allocation2 + $0xf8] sm:$0xff] %vm264, 0.0
      $region36: #{tpu_custom_call.1} parent=31 // pred_fallthru
        _
      %v297 = vld [vmem:[#allocation2] sm:$0xff]
      %v298 = vld [vmem:[#allocation2 + $0x8] sm:$0xff]
      %v299 = vld [vmem:[#allocation2 + $0x10] sm:$0xff]
      %v300 = vld [vmem:[#allocation2 + $0x18] sm:$0xff]
      %v301 = vld [vmem:[#allocation2 + $0x20] sm:$0xff]
      %v302 = vld [vmem:[#allocation2 + $0x28] sm:$0xff]
      %v303 = vld [vmem:[#allocation2 + $0x30] sm:$0xff]
      %v304 = vld [vmem:[#allocation2 + $0x38] sm:$0xff]
      %v305 = vld [vmem:[#allocation2 + $0x40] sm:$0xff]
      %v306 = vld [vmem:[#allocation2 + $0x48] sm:$0xff]
      %v307 = vld [vmem:[#allocation2 + $0x50] sm:$0xff]
      %v308 = vld [vmem:[#allocation2 + $0x58] sm:$0xff]
      %v309 = vld [vmem:[#allocation2 + $0x60] sm:$0xff]
      %v310 = vld [vmem:[#allocation2 + $0x68] sm:$0xff]
      %v311 = vld [vmem:[#allocation2 + $0x70] sm:$0xff]
      %v312 = vld [vmem:[#allocation2 + $0x78] sm:$0xff]
      %v313 = vld [vmem:[#allocation2 + $0x80] sm:$0xff]
      %v314 = vld [vmem:[#allocation2 + $0x88] sm:$0xff]
      %v315 = vld [vmem:[#allocation2 + $0x90] sm:$0xff]
      %v316 = vld [vmem:[#allocation2 + $0x98] sm:$0xff]
      %v317 = vld [vmem:[#allocation2 + $0xa0] sm:$0xff]
      %v318 = vld [vmem:[#allocation2 + $0xa8] sm:$0xff]
      %v319 = vld [vmem:[#allocation2 + $0xb0] sm:$0xff]
      %v320 = vld [vmem:[#allocation2 + $0xb8] sm:$0xff]
      %v321 = vld [vmem:[#allocation2 + $0xc0] sm:$0xff]
      %v322 = vld [vmem:[#allocation2 + $0xc8] sm:$0xff]
      %v323 = vld [vmem:[#allocation2 + $0xd0] sm:$0xff]
      %v324 = vld [vmem:[#allocation2 + $0xd8] sm:$0xff]
      %v325 = vld [vmem:[#allocation2 + $0xe0] sm:$0xff]
      %v326 = vld [vmem:[#allocation2 + $0xe8] sm:$0xff]
      %v327 = vld [vmem:[#allocation2 + $0xf0] sm:$0xff]
      %v328 = vld [vmem:[#allocation2 + $0xf8] sm:$0xff]
      %v329 = vld [vmem:[%s236] sm:$0xf]
      %v330 = vld [vmem:[%s236 + $0x4] sm:$0xf]
      %v331 = vld [vmem:[%s236 + $0x8] sm:$0xf]
      %v332 = vld [vmem:[%s236 + $0xc] sm:$0xf]
      %v333 = vld [vmem:[%s236 + $0x10] sm:$0xf]
      %v334 = vld [vmem:[%s236 + $0x14] sm:$0xf]
      %v335 = vld [vmem:[%s236 + $0x18] sm:$0xf]
      %v336 = vld [vmem:[%s236 + $0x1c] sm:$0xf]
      %v337 = vld [vmem:[%s236 + $0x20] sm:$0xf]
      %v338 = vld [vmem:[%s236 + $0x24] sm:$0xf]
      %v339 = vld [vmem:[%s236 + $0x28] sm:$0xf]
      %v340 = vld [vmem:[%s236 + $0x2c] sm:$0xf]
      %v341 = vld [vmem:[%s236 + $0x30] sm:$0xf]
      %v342 = vld [vmem:[%s236 + $0x34] sm:$0xf]
      %v343 = vld [vmem:[%s236 + $0x38] sm:$0xf]
      %v344 = vld [vmem:[%s236 + $0x3c] sm:$0xf]
      %v345 = vld [vmem:[%s236 + $0x40] sm:$0xf]
      %v346 = vld [vmem:[%s236 + $0x44] sm:$0xf]
      %v347 = vld [vmem:[%s236 + $0x48] sm:$0xf]
      %v348 = vld [vmem:[%s236 + $0x4c] sm:$0xf]
      %v349 = vld [vmem:[%s236 + $0x50] sm:$0xf]
      %v350 = vld [vmem:[%s236 + $0x54] sm:$0xf]
      %v351 = vld [vmem:[%s236 + $0x58] sm:$0xf]
      %v352 = vld [vmem:[%s236 + $0x5c] sm:$0xf]
      %v353 = vld [vmem:[%s236 + $0x60] sm:$0xf]
      %v354 = vld [vmem:[%s236 + $0x64] sm:$0xf]
      %v355 = vld [vmem:[%s236 + $0x68] sm:$0xf]
      %v356 = vld [vmem:[%s236 + $0x6c] sm:$0xf]
      %v357 = vld [vmem:[%s236 + $0x70] sm:$0xf]
      %v358 = vld [vmem:[%s236 + $0x74] sm:$0xf]
      %v359 = vld [vmem:[%s236 + $0x78] sm:$0xf]
      %v360 = vld [vmem:[%s236 + $0x7c] sm:$0xf]
      %v361 = vld [vmem:[%s245] sm:$0xf]
      %v362 = vld [vmem:[%s245 + $0x4] sm:$0xf]
      %v363 = vld [vmem:[%s245 + $0x8] sm:$0xf]
      %v364 = vld [vmem:[%s245 + $0xc] sm:$0x3]
      %v397 = vunpack.c.l.b16 %v329
      %v398 = vunpack.c.l.b16 %v330
      %v399 = vunpack.c.l.b16 %v331
      %v400 = vunpack.c.l.b16 %v332
      %v401 = vunpack.c.l.b16 %v333
      %v402 = vunpack.c.l.b16 %v334
      %v403 = vunpack.c.l.b16 %v335
      %v404 = vunpack.c.l.b16 %v336
      %v405 = vunpack.c.l.b16 %v337
      %v406 = vunpack.c.l.b16 %v338
      %v407 = vunpack.c.l.b16 %v339
      %v408 = vunpack.c.l.b16 %v340
      %v409 = vunpack.c.l.b16 %v341
      %v410 = vunpack.c.l.b16 %v342
      %v411 = vunpack.c.l.b16 %v343
      %v412 = vunpack.c.l.b16 %v344
      %v413 = vunpack.c.l.b16 %v345
      %v414 = vunpack.c.l.b16 %v346
      %v415 = vunpack.c.l.b16 %v347
      %v416 = vunpack.c.l.b16 %v348
      %v417 = vunpack.c.l.b16 %v349
      %v418 = vunpack.c.l.b16 %v350
      %v419 = vunpack.c.l.b16 %v351
      %v420 = vunpack.c.l.b16 %v352
      %v421 = vunpack.c.l.b16 %v353
      %v422 = vunpack.c.l.b16 %v354
      %v423 = vunpack.c.l.b16 %v355
      %v424 = vunpack.c.l.b16 %v356
      %v425 = vunpack.c.l.b16 %v357
      %v426 = vunpack.c.l.b16 %v358
      %v427 = vunpack.c.l.b16 %v359
      %v428 = vunpack.c.l.b16 %v360
      %v429 = vpack.c.b16 %v398, %v397
      %v430 = vpack.c.b16 %v400, %v399
      %v431 = vpack.c.b16 %v402, %v401
      %v432 = vpack.c.b16 %v404, %v403
      %v433 = vpack.c.b16 %v406, %v405
      %v434 = vpack.c.b16 %v408, %v407
      %v435 = vpack.c.b16 %v410, %v409
      %v436 = vpack.c.b16 %v412, %v411
      %v437 = vpack.c.b16 %v414, %v413
      %v438 = vpack.c.b16 %v416, %v415
      %v439 = vpack.c.b16 %v418, %v417
      %v440 = vpack.c.b16 %v420, %v419
      %v441 = vpack.c.b16 %v422, %v421
      %v442 = vpack.c.b16 %v424, %v423
      %v443 = vpack.c.b16 %v426, %v425
      %v444 = vpack.c.b16 %v428, %v427
      %v449 = vunpack.c.l.b16 %v361
      %v450 = vunpack.c.l.b16 %v362
      %v451 = vunpack.c.l.b16 %v363
      %v452 = vunpack.c.l.b16 %v364
      %v453 = vpack.c.b16 %v450, %v449
      %v454 = vpack.c.b16 %v452, %v451
      %vm456 = vcmask 220160
      %v458 = vsel %vm456, %v429, 0
      %v461 = vsel %vm456, %v430, 0
      %v464 = vsel %vm456, %v431, 0
      %v467 = vsel %vm456, %v432, 0
      %v470 = vsel %vm456, %v433, 0
      %v473 = vsel %vm456, %v434, 0
      %v476 = vsel %vm456, %v435, 0
      %v479 = vsel %vm456, %v436, 0
      %v482 = vsel %vm456, %v437, 0
      %v485 = vsel %vm456, %v438, 0
      %v488 = vsel %vm456, %v439, 0
      %v491 = vsel %vm456, %v440, 0
      %v494 = vsel %vm456, %v441, 0
      %v497 = vsel %vm456, %v442, 0
      %v500 = vsel %vm456, %v443, 0
      %v503 = vsel %vm456, %v444, 0
      %vm505 = vcmask 1044480
      %vm506 = vcmask 1045504
      %v507 = vsel %vm505, 4294967295, 65535
      %v508 = vsel %vm506, %v507, 0
      %v510 = vand.u32 %v454, %v508
      %512 = vmatprep.subr.bf16.mxu0 0
      %513 = vmatpush1.bf16.msra.mxu0 %v453
      %514 = vmatprep.subr.bf16.mxu0 0
      %515 = vmatpush1.bf16.msra.mxu0 %v510
      %516 = vmatprep.subr.bf16.mxu0 0
      %517 = vmatpush1.bf16.msra.mxu0 0
      %518 = vmatprep.subr.bf16.mxu0 0
      %519 = vmatpush1.bf16.msra.mxu0 0
      %520 = vmatprep.subr.bf16.mxu0 0
      %521 = vmatpush1.bf16.msra.mxu0 0
      %522 = vmatprep.subr.bf16.mxu0 0
      %523 = vmatpush1.bf16.msra.mxu0 0
      %524 = vmatprep.subr.bf16.mxu0 0
      %525 = vmatpush1.bf16.msra.mxu0 0
      %526 = vmatprep.subr.bf16.mxu0 0
      %527 = vmatpush1.bf16.msra.mxu0 0
      %528 = vmatprep.subr.bf16.mxu0 0
      %529 = vmatpush1.bf16.msra.mxu0 0
      %530 = vmatprep.subr.bf16.mxu0 0
      %531 = vmatpush1.bf16.msra.mxu0 0
      %532 = vmatprep.subr.bf16.mxu0 0
      %533 = vmatpush1.bf16.msra.mxu0 0
      %534 = vmatprep.subr.bf16.mxu0 0
      %535 = vmatpush1.bf16.msra.mxu0 0
      %536 = vmatprep.subr.bf16.mxu0 0
      %537 = vmatpush1.bf16.msra.mxu0 0
      %538 = vmatprep.subr.bf16.mxu0 0
      %539 = vmatpush1.bf16.msra.mxu0 0
      %540 = vmatprep.subr.bf16.mxu0 0
      %541 = vmatpush1.bf16.msra.mxu0 0
      %542 = vmatprep.subr.bf16.mxu0 0
      %543 = vmatpush1.bf16.msra.mxu0 0
      %544 = vmatprep.mubr.bf16.mxu0 0
      %545 = vmatmul.mubr.bf16.gmra.mrb[0].mxu0 %v458
      %v546 = vpop.f32.mrb[0].mxu0
      %v547 = vadd.f32 0.0, %v546
      %v548 = vpop.f32.mrb[0].mxu0
      %v549 = vpop.f32.mrb[0].mxu0
      %v550 = vadd.f32 0.0, %v549
      %v551 = vpop.f32.mrb[0].mxu0
      %552 = vmatprep.mubr.bf16.mxu0 0
      %553 = vmatmul.mubr.bf16.gmra.mrb[0].mxu0 %v461
      %v554 = vpop.f32.mrb[0].mxu0
      %v555 = vadd.f32 0.0, %v554
      %v556 = vpop.f32.mrb[0].mxu0
      %v557 = vpop.f32.mrb[0].mxu0
      %v558 = vadd.f32 0.0, %v557
      %v559 = vpop.f32.mrb[0].mxu0
      %560 = vmatprep.mubr.bf16.mxu0 0
      %561 = vmatmul.mubr.bf16.gmra.mrb[0].mxu0 %v464
      %v562 = vpop.f32.mrb[0].mxu0
      %v563 = vadd.f32 0.0, %v562
      %v564 = vpop.f32.mrb[0].mxu0
      %v565 = vpop.f32.mrb[0].mxu0
      %v566 = vadd.f32 0.0, %v565
      %v567 = vpop.f32.mrb[0].mxu0
      %568 = vmatprep.mubr.bf16.mxu0 0
      %569 = vmatmul.mubr.bf16.gmra.mrb[0].mxu0 %v467
      %v570 = vpop.f32.mrb[0].mxu0
      %v571 = vadd.f32 0.0, %v570
      %v572 = vpop.f32.mrb[0].mxu0
      %v573 = vpop.f32.mrb[0].mxu0
      %v574 = vadd.f32 0.0, %v573
      %v575 = vpop.f32.mrb[0].mxu0
      %576 = vmatprep.mubr.bf16.mxu0 0
      %577 = vmatmul.mubr.bf16.gmra.mrb[0].mxu0 %v470
      %v578 = vpop.f32.mrb[0].mxu0
      %v579 = vadd.f32 0.0, %v578
      %v580 = vpop.f32.mrb[0].mxu0
      %v581 = vpop.f32.mrb[0].mxu0
      %v582 = vadd.f32 0.0, %v581
      %v583 = vpop.f32.mrb[0].mxu0
      %584 = vmatprep.mubr.bf16.mxu0 0
      %585 = vmatmul.mubr.bf16.gmra.mrb[0].mxu0 %v473
      %v586 = vpop.f32.mrb[0].mxu0
      %v587 = vadd.f32 0.0, %v586
      %v588 = vpop.f32.mrb[0].mxu0
      %v589 = vpop.f32.mrb[0].mxu0
      %v590 = vadd.f32 0.0, %v589
      %v591 = vpop.f32.mrb[0].mxu0
      %592 = vmatprep.mubr.bf16.mxu0 0
      %593 = vmatmul.mubr.bf16.gmra.mrb[0].mxu0 %v476
      %v594 = vpop.f32.mrb[0].mxu0
      %v595 = vadd.f32 0.0, %v594
      %v596 = vpop.f32.mrb[0].mxu0
      %v597 = vpop.f32.mrb[0].mxu0
      %v598 = vadd.f32 0.0, %v597
      %v599 = vpop.f32.mrb[0].mxu0
      %600 = vmatprep.mubr.bf16.mxu0 0
      %601 = vmatmul.mubr.bf16.gmra.mrb[0].mxu0 %v479
      %v602 = vpop.f32.mrb[0].mxu0
      %v603 = vadd.f32 0.0, %v602
      %v604 = vpop.f32.mrb[0].mxu0
      %v605 = vpop.f32.mrb[0].mxu0
      %v606 = vadd.f32 0.0, %v605
      %v607 = vpop.f32.mrb[0].mxu0
      %608 = vmatprep.mubr.bf16.mxu0 0
      %609 = vmatmul.mubr.bf16.gmra.mrb[0].mxu0 %v482
      %v610 = vpop.f32.mrb[0].mxu0
      %v611 = vadd.f32 0.0, %v610
      %v612 = vpop.f32.mrb[0].mxu0
      %v613 = vpop.f32.mrb[0].mxu0
      %v614 = vadd.f32 0.0, %v613
      %v615 = vpop.f32.mrb[0].mxu0
      %616 = vmatprep.mubr.bf16.mxu0 0
      %617 = vmatmul.mubr.bf16.gmra.mrb[0].mxu0 %v485
      %v618 = vpop.f32.mrb[0].mxu0
      %v619 = vadd.f32 0.0, %v618
      %v620 = vpop.f32.mrb[0].mxu0
      %v621 = vpop.f32.mrb[0].mxu0
      %v622 = vadd.f32 0.0, %v621
      %v623 = vpop.f32.mrb[0].mxu0
      %624 = vmatprep.mubr.bf16.mxu0 0
      %625 = vmatmul.mubr.bf16.gmra.mrb[0].mxu0 %v488
      %v626 = vpop.f32.mrb[0].mxu0
      %v627 = vadd.f32 0.0, %v626
      %v628 = vpop.f32.mrb[0].mxu0
      %v629 = vpop.f32.mrb[0].mxu0
      %v630 = vadd.f32 0.0, %v629
      %v631 = vpop.f32.mrb[0].mxu0
      %632 = vmatprep.mubr.bf16.mxu0 0
      %633 = vmatmul.mubr.bf16.gmra.mrb[0].mxu0 %v491
      %v634 = vpop.f32.mrb[0].mxu0
      %v635 = vadd.f32 0.0, %v634
      %v636 = vpop.f32.mrb[0].mxu0
      %v637 = vpop.f32.mrb[0].mxu0
      %v638 = vadd.f32 0.0, %v637
      %v639 = vpop.f32.mrb[0].mxu0
      %640 = vmatprep.mubr.bf16.mxu0 0
      %641 = vmatmul.mubr.bf16.gmra.mrb[0].mxu0 %v494
      %v642 = vpop.f32.mrb[0].mxu0
      %v643 = vadd.f32 0.0, %v642
      %v644 = vpop.f32.mrb[0].mxu0
      %v645 = vpop.f32.mrb[0].mxu0
      %v646 = vadd.f32 0.0, %v645
      %v647 = vpop.f32.mrb[0].mxu0
      %648 = vmatprep.mubr.bf16.mxu0 0
      %649 = vmatmul.mubr.bf16.gmra.mrb[0].mxu0 %v497
      %v650 = vpop.f32.mrb[0].mxu0
      %v651 = vadd.f32 0.0, %v650
      %v652 = vpop.f32.mrb[0].mxu0
      %v653 = vpop.f32.mrb[0].mxu0
      %v654 = vadd.f32 0.0, %v653
      %v655 = vpop.f32.mrb[0].mxu0
      %656 = vmatprep.mubr.bf16.mxu0 0
      %657 = vmatmul.mubr.bf16.gmra.mrb[0].mxu0 %v500
      %v658 = vpop.f32.mrb[0].mxu0
      %v659 = vadd.f32 0.0, %v658
      %v660 = vpop.f32.mrb[0].mxu0
      %v661 = vpop.f32.mrb[0].mxu0
      %v662 = vadd.f32 0.0, %v661
      %v663 = vpop.f32.mrb[0].mxu0
      %664 = vmatprep.mubr.bf16.mxu0 0
      %665 = vmatmul.mubr.bf16.gmra.mrb[0].mxu0 %v503
      %v666 = vpop.f32.mrb[0].mxu0
      %v667 = vadd.f32 0.0, %v666
      %v668 = vpop.f32.mrb[0].mxu0
      %v669 = vpop.f32.mrb[0].mxu0
      %v670 = vadd.f32 0.0, %v669
      %v671 = vpop.f32.mrb[0].mxu0
      %672 = vdwg.mxu0
      %v673 = vadd.f32 %v297, %v547
      %v674 = vadd.f32 %v298, %v550
      %v675 = vadd.f32 %v299, %v555
      %v676 = vadd.f32 %v300, %v558
      %v677 = vadd.f32 %v301, %v563
      %v678 = vadd.f32 %v302, %v566
      %v679 = vadd.f32 %v303, %v571
      %v680 = vadd.f32 %v304, %v574
      %v681 = vadd.f32 %v305, %v579
      %v682 = vadd.f32 %v306, %v582
      %v683 = vadd.f32 %v307, %v587
      %v684 = vadd.f32 %v308, %v590
      %v685 = vadd.f32 %v309, %v595
      %v686 = vadd.f32 %v310, %v598
      %v687 = vadd.f32 %v311, %v603
      %v688 = vadd.f32 %v312, %v606
      %v689 = vadd.f32 %v313, %v611
      %v690 = vadd.f32 %v314, %v614
      %v691 = vadd.f32 %v315, %v619
      %v692 = vadd.f32 %v316, %v622
      %v693 = vadd.f32 %v317, %v627
      %v694 = vadd.f32 %v318, %v630
      %v695 = vadd.f32 %v319, %v635
      %v696 = vadd.f32 %v320, %v638
      %v697 = vadd.f32 %v321, %v643
      %v698 = vadd.f32 %v322, %v646
      %v699 = vadd.f32 %v323, %v651
      %v700 = vadd.f32 %v324, %v654
      %v701 = vadd.f32 %v325, %v659
      %v702 = vadd.f32 %v326, %v662
      %v703 = vadd.f32 %v327, %v667
      %v704 = vadd.f32 %v328, %v670
      %vm705 = vcmask 523264
      %706 = vst.msk [vmem:[#allocation2] sm:$0xff] %vm705, %v673
      %707 = vst.msk [vmem:[#allocation2 + $0x8] sm:$0xff] %vm705, %v674
      %708 = vst.msk [vmem:[#allocation2 + $0x10] sm:$0xff] %vm705, %v675
      %709 = vst.msk [vmem:[#allocation2 + $0x18] sm:$0xff] %vm705, %v676
      %710 = vst.msk [vmem:[#allocation2 + $0x20] sm:$0xff] %vm705, %v677
      %711 = vst.msk [vmem:[#allocation2 + $0x28] sm:$0xff] %vm705, %v678
      %712 = vst.msk [vmem:[#allocation2 + $0x30] sm:$0xff] %vm705, %v679
      %713 = vst.msk [vmem:[#allocation2 + $0x38] sm:$0xff] %vm705, %v680
      %714 = vst.msk [vmem:[#allocation2 + $0x40] sm:$0xff] %vm705, %v681
      %715 = vst.msk [vmem:[#allocation2 + $0x48] sm:$0xff] %vm705, %v682
      %716 = vst.msk [vmem:[#allocation2 + $0x50] sm:$0xff] %vm705, %v683
      %717 = vst.msk [vmem:[#allocation2 + $0x58] sm:$0xff] %vm705, %v684
      %718 = vst.msk [vmem:[#allocation2 + $0x60] sm:$0xff] %vm705, %v685
      %719 = vst.msk [vmem:[#allocation2 + $0x68] sm:$0xff] %vm705, %v686
      %720 = vst.msk [vmem:[#allocation2 + $0x70] sm:$0xff] %vm705, %v687
      %721 = vst.msk [vmem:[#allocation2 + $0x78] sm:$0xff] %vm705, %v688
      %722 = vst.msk [vmem:[#allocation2 + $0x80] sm:$0xff] %vm705, %v689
      %723 = vst.msk [vmem:[#allocation2 + $0x88] sm:$0xff] %vm705, %v690
      %724 = vst.msk [vmem:[#allocation2 + $0x90] sm:$0xff] %vm705, %v691
      %725 = vst.msk [vmem:[#allocation2 + $0x98] sm:$0xff] %vm705, %v692
      %726 = vst.msk [vmem:[#allocation2 + $0xa0] sm:$0xff] %vm705, %v693
      %727 = vst.msk [vmem:[#allocation2 + $0xa8] sm:$0xff] %vm705, %v694
      %728 = vst.msk [vmem:[#allocation2 + $0xb0] sm:$0xff] %vm705, %v695
      %729 = vst.msk [vmem:[#allocation2 + $0xb8] sm:$0xff] %vm705, %v696
      %730 = vst.msk [vmem:[#allocation2 + $0xc0] sm:$0xff] %vm705, %v697
      %731 = vst.msk [vmem:[#allocation2 + $0xc8] sm:$0xff] %vm705, %v698
      %732 = vst.msk [vmem:[#allocation2 + $0xd0] sm:$0xff] %vm705, %v699
      %733 = vst.msk [vmem:[#allocation2 + $0xd8] sm:$0xff] %vm705, %v700
      %734 = vst.msk [vmem:[#allocation2 + $0xe0] sm:$0xff] %vm705, %v701
      %735 = vst.msk [vmem:[#allocation2 + $0xe8] sm:$0xff] %vm705, %v702
      %736 = vst.msk [vmem:[#allocation2 + $0xf0] sm:$0xff] %vm705, %v703
      %737 = vst.msk [vmem:[#allocation2 + $0xf8] sm:$0xff] %vm705, %v704
      // Predicated region
      $region37: #{tpu_custom_call.1} parent=31 // pred_check
        %p738 = pneg %p260
      $region38: #{tpu_custom_call.1} parent=31 // pred_check_branch
        %740 = sbr.rel (%p738) target = $region40
      $region39: #{tpu_custom_call.1} parent=31 // pred_region
        %v741 = vld [vmem:[#allocation2] sm:$0xff]
        %v742 = vld [vmem:[#allocation2 + $0x8] sm:$0xff]
        %v743 = vld [vmem:[#allocation2 + $0x10] sm:$0xff]
        %v744 = vld [vmem:[#allocation2 + $0x18] sm:$0xff]
        %v745 = vld [vmem:[#allocation2 + $0x20] sm:$0xff]
        %v746 = vld [vmem:[#allocation2 + $0x28] sm:$0xff]
        %v747 = vld [vmem:[#allocation2 + $0x30] sm:$0xff]
        %v748 = vld [vmem:[#allocation2 + $0x38] sm:$0xff]
        %v749 = vld [vmem:[#allocation2 + $0x40] sm:$0xff]
        %v750 = vld [vmem:[#allocation2 + $0x48] sm:$0xff]
        %v751 = vld [vmem:[#allocation2 + $0x50] sm:$0xff]
        %v752 = vld [vmem:[#allocation2 + $0x58] sm:$0xff]
        %v753 = vld [vmem:[#allocation2 + $0x60] sm:$0xff]
        %v754 = vld [vmem:[#allocation2 + $0x68] sm:$0xff]
        %v755 = vld [vmem:[#allocation2 + $0x70] sm:$0xff]
        %v756 = vld [vmem:[#allocation2 + $0x78] sm:$0xff]
        %v757 = vld [vmem:[#allocation2 + $0x80] sm:$0xff]
        %v758 = vld [vmem:[#allocation2 + $0x88] sm:$0xff]
        %v759 = vld [vmem:[#allocation2 + $0x90] sm:$0xff]
        %v760 = vld [vmem:[#allocation2 + $0x98] sm:$0xff]
        %v761 = vld [vmem:[#allocation2 + $0xa0] sm:$0xff]
        %v762 = vld [vmem:[#allocation2 + $0xa8] sm:$0xff]
        %v763 = vld [vmem:[#allocation2 + $0xb0] sm:$0xff]
        %v764 = vld [vmem:[#allocation2 + $0xb8] sm:$0xff]
        %v765 = vld [vmem:[#allocation2 + $0xc0] sm:$0xff]
        %v766 = vld [vmem:[#allocation2 + $0xc8] sm:$0xff]
        %v767 = vld [vmem:[#allocation2 + $0xd0] sm:$0xff]
        %v768 = vld [vmem:[#allocation2 + $0xd8] sm:$0xff]
        %v769 = vld [vmem:[#allocation2 + $0xe0] sm:$0xff]
        %v770 = vld [vmem:[#allocation2 + $0xe8] sm:$0xff]
        %v771 = vld [vmem:[#allocation2 + $0xf0] sm:$0xff]
        %v772 = vld [vmem:[#allocation2 + $0xf8] sm:$0xff]
        %v773 = vld [vmem:[%s249] sm:$0x1]
        %v775 = vlaneseq
        %v776 = vshrl.u32 %v775, 7
        %v777 = vsub.s32 0, %v776
        %v778 = vrot.slane %v773, %v777
        %v780 = vadd.f32 %v741, %v778
        %v781 = vadd.f32 %v742, %v778
        %v782 = vadd.f32 %v743, %v778
        %v783 = vadd.f32 %v744, %v778
        %v784 = vadd.f32 %v745, %v778
        %v785 = vadd.f32 %v746, %v778
        %v786 = vadd.f32 %v747, %v778
        %v787 = vadd.f32 %v748, %v778
        %v788 = vadd.f32 %v749, %v778
        %v789 = vadd.f32 %v750, %v778
        %v790 = vadd.f32 %v751, %v778
        %v791 = vadd.f32 %v752, %v778
        %v792 = vadd.f32 %v753, %v778
        %v793 = vadd.f32 %v754, %v778
        %v794 = vadd.f32 %v755, %v778
        %v795 = vadd.f32 %v756, %v778
        %v796 = vadd.f32 %v757, %v778
        %v797 = vadd.f32 %v758, %v778
        %v798 = vadd.f32 %v759, %v778
        %v799 = vadd.f32 %v760, %v778
        %v800 = vadd.f32 %v761, %v778
        %v801 = vadd.f32 %v762, %v778
        %v802 = vadd.f32 %v763, %v778
        %v803 = vadd.f32 %v764, %v778
        %v804 = vadd.f32 %v765, %v778
        %v805 = vadd.f32 %v766, %v778
        %v806 = vadd.f32 %v767, %v778
        %v807 = vadd.f32 %v768, %v778
        %v808 = vadd.f32 %v769, %v778
        %v809 = vadd.f32 %v770, %v778
        %v810 = vadd.f32 %v771, %v778
        %v811 = vadd.f32 %v772, %v778
        %v812 = vmax.f32 %v780, 0.0
        %v813 = vmax.f32 %v781, 0.0
        %v814 = vmax.f32 %v782, 0.0
        %v815 = vmax.f32 %v783, 0.0
        %v816 = vmax.f32 %v784, 0.0
        %v817 = vmax.f32 %v785, 0.0
        %v818 = vmax.f32 %v786, 0.0
        %v819 = vmax.f32 %v787, 0.0
        %v820 = vmax.f32 %v788, 0.0
        %v821 = vmax.f32 %v789, 0.0
        %v822 = vmax.f32 %v790, 0.0
        %v823 = vmax.f32 %v791, 0.0
        %v824 = vmax.f32 %v792, 0.0
        %v825 = vmax.f32 %v793, 0.0
        %v826 = vmax.f32 %v794, 0.0
        %v827 = vmax.f32 %v795, 0.0
        %v828 = vmax.f32 %v796, 0.0
        %v829 = vmax.f32 %v797, 0.0
        %v830 = vmax.f32 %v798, 0.0
        %v831 = vmax.f32 %v799, 0.0
        %v832 = vmax.f32 %v800, 0.0
        %v833 = vmax.f32 %v801, 0.0
        %v834 = vmax.f32 %v802, 0.0
        %v835 = vmax.f32 %v803, 0.0
        %v836 = vmax.f32 %v804, 0.0
        %v837 = vmax.f32 %v805, 0.0
        %v838 = vmax.f32 %v806, 0.0
        %v839 = vmax.f32 %v807, 0.0
        %v840 = vmax.f32 %v808, 0.0
        %v841 = vmax.f32 %v809, 0.0
        %v842 = vmax.f32 %v810, 0.0
        %v843 = vmax.f32 %v811, 0.0
        %v844 = vpack.c.bf16 %v813, %v812
        %v845 = vpack.c.bf16 %v815, %v814
        %v846 = vpack.c.bf16 %v817, %v816
        %v847 = vpack.c.bf16 %v819, %v818
        %v848 = vpack.c.bf16 %v821, %v820
        %v849 = vpack.c.bf16 %v823, %v822
        %v850 = vpack.c.bf16 %v825, %v824
        %v851 = vpack.c.bf16 %v827, %v826
        %v852 = vpack.c.bf16 %v829, %v828
        %v853 = vpack.c.bf16 %v831, %v830
        %v854 = vpack.c.bf16 %v833, %v832
        %v855 = vpack.c.bf16 %v835, %v834
        %v856 = vpack.c.bf16 %v837, %v836
        %v857 = vpack.c.bf16 %v839, %v838
        %v858 = vpack.c.bf16 %v841, %v840
        %v859 = vpack.c.bf16 %v843, %v842
        %v876 = vunpack.c.l.b16 %v844
        %v877 = vunpack.c.h.b16 %v844
        %v878 = vunpack.c.l.b16 %v845
        %v879 = vunpack.c.h.b16 %v845
        %v880 = vunpack.c.l.b16 %v846
        %v881 = vunpack.c.h.b16 %v846
        %v882 = vunpack.c.l.b16 %v847
        %v883 = vunpack.c.h.b16 %v847
        %v884 = vunpack.c.l.b16 %v848
        %v885 = vunpack.c.h.b16 %v848
        %v886 = vunpack.c.l.b16 %v849
        %v887 = vunpack.c.h.b16 %v849
        %v888 = vunpack.c.l.b16 %v850
        %v889 = vunpack.c.h.b16 %v850
        %v890 = vunpack.c.l.b16 %v851
        %v891 = vunpack.c.h.b16 %v851
        %v892 = vunpack.c.l.b16 %v852
        %v893 = vunpack.c.h.b16 %v852
        %v894 = vunpack.c.l.b16 %v853
        %v895 = vunpack.c.h.b16 %v853
        %v896 = vunpack.c.l.b16 %v854
        %v897 = vunpack.c.h.b16 %v854
        %v898 = vunpack.c.l.b16 %v855
        %v899 = vunpack.c.h.b16 %v855
        %v900 = vunpack.c.l.b16 %v856
        %v901 = vunpack.c.h.b16 %v856
        %v902 = vunpack.c.l.b16 %v857
        %v903 = vunpack.c.h.b16 %v857
        %v904 = vunpack.c.l.b16 %v858
        %v905 = vunpack.c.h.b16 %v858
        %v906 = vunpack.c.l.b16 %v859
        %v907 = vunpack.c.h.b16 %v859
        %v908 = vpack.c.b16 %v876, %v876
        %v909 = vpack.c.b16 %v877, %v877
        %v910 = vpack.c.b16 %v878, %v878
        %v911 = vpack.c.b16 %v879, %v879
        %v912 = vpack.c.b16 %v880, %v880
        %v913 = vpack.c.b16 %v881, %v881
        %v914 = vpack.c.b16 %v882, %v882
        %v915 = vpack.c.b16 %v883, %v883
        %v916 = vpack.c.b16 %v884, %v884
        %v917 = vpack.c.b16 %v885, %v885
        %v918 = vpack.c.b16 %v886, %v886
        %v919 = vpack.c.b16 %v887, %v887
        %v920 = vpack.c.b16 %v888, %v888
        %v921 = vpack.c.b16 %v889, %v889
        %v922 = vpack.c.b16 %v890, %v890
        %v923 = vpack.c.b16 %v891, %v891
        %v924 = vpack.c.b16 %v892, %v892
        %v925 = vpack.c.b16 %v893, %v893
        %v926 = vpack.c.b16 %v894, %v894
        %v927 = vpack.c.b16 %v895, %v895
        %v928 = vpack.c.b16 %v896, %v896
        %v929 = vpack.c.b16 %v897, %v897
        %v930 = vpack.c.b16 %v898, %v898
        %v931 = vpack.c.b16 %v899, %v899
        %v932 = vpack.c.b16 %v900, %v900
        %v933 = vpack.c.b16 %v901, %v901
        %v934 = vpack.c.b16 %v902, %v902
        %v935 = vpack.c.b16 %v903, %v903
        %v936 = vpack.c.b16 %v904, %v904
        %v937 = vpack.c.b16 %v905, %v905
        %v938 = vpack.c.b16 %v906, %v906
        %v939 = vpack.c.b16 %v907, %v907
        %vm972 = vcmask 519168
        %973 = vst.msk [vmem:[%s257] sm:$0xf] %vm972, %v908
        %974 = vst.msk [vmem:[%s257 + $0x4] sm:$0xf] %vm972, %v909
        %975 = vst.msk [vmem:[%s257 + $0x8] sm:$0xf] %vm972, %v910
        %976 = vst.msk [vmem:[%s257 + $0xc] sm:$0xf] %vm972, %v911
        %977 = vst.msk [vmem:[%s257 + $0x10] sm:$0xf] %vm972, %v912
        %978 = vst.msk [vmem:[%s257 + $0x14] sm:$0xf] %vm972, %v913
        %979 = vst.msk [vmem:[%s257 + $0x18] sm:$0xf] %vm972, %v914
        %980 = vst.msk [vmem:[%s257 + $0x1c] sm:$0xf] %vm972, %v915
        %981 = vst.msk [vmem:[%s257 + $0x20] sm:$0xf] %vm972, %v916
        %982 = vst.msk [vmem:[%s257 + $0x24] sm:$0xf] %vm972, %v917
        %983 = vst.msk [vmem:[%s257 + $0x28] sm:$0xf] %vm972, %v918
        %984 = vst.msk [vmem:[%s257 + $0x2c] sm:$0xf] %vm972, %v919
        %985 = vst.msk [vmem:[%s257 + $0x30] sm:$0xf] %vm972, %v920
        %986 = vst.msk [vmem:[%s257 + $0x34] sm:$0xf] %vm972, %v921
        %987 = vst.msk [vmem:[%s257 + $0x38] sm:$0xf] %vm972, %v922
        %988 = vst.msk [vmem:[%s257 + $0x3c] sm:$0xf] %vm972, %v923
        %989 = vst.msk [vmem:[%s257 + $0x40] sm:$0xf] %vm972, %v924
        %990 = vst.msk [vmem:[%s257 + $0x44] sm:$0xf] %vm972, %v925
        %991 = vst.msk [vmem:[%s257 + $0x48] sm:$0xf] %vm972, %v926
        %992 = vst.msk [vmem:[%s257 + $0x4c] sm:$0xf] %vm972, %v927
        %993 = vst.msk [vmem:[%s257 + $0x50] sm:$0xf] %vm972, %v928
        %994 = vst.msk [vmem:[%s257 + $0x54] sm:$0xf] %vm972, %v929
        %995 = vst.msk [vmem:[%s257 + $0x58] sm:$0xf] %vm972, %v930
        %996 = vst.msk [vmem:[%s257 + $0x5c] sm:$0xf] %vm972, %v931
        %997 = vst.msk [vmem:[%s257 + $0x60] sm:$0xf] %vm972, %v932
        %998 = vst.msk [vmem:[%s257 + $0x64] sm:$0xf] %vm972, %v933
        %999 = vst.msk [vmem:[%s257 + $0x68] sm:$0xf] %vm972, %v934
        %1000 = vst.msk [vmem:[%s257 + $0x6c] sm:$0xf] %vm972, %v935
        %1001 = vst.msk [vmem:[%s257 + $0x70] sm:$0xf] %vm972, %v936
        %1002 = vst.msk [vmem:[%s257 + $0x74] sm:$0xf] %vm972, %v937
        %1003 = vst.msk [vmem:[%s257 + $0x78] sm:$0xf] %vm972, %v938
        %1004 = vst.msk [vmem:[%s257 + $0x7c] sm:$0xf] %vm972, %v939
      $region40: #{tpu_custom_call.1} parent=31 // pred_fallthru
        _
      %s1005 = smul.u32 32, %s19
      %p1006 = scmp.lt.s32.totalorder %s1005, 63
      %s1007 = scalar_select %p1006, %s1005, 63
      %p1008 = scmp.lt.s32.totalorder %s20, 0
      %s1009 = scalar_select %p1008, %s20, 0
      %s1010 = sadd.s32 %s1009, %s1007
      %s1011 = smul.addr %s1010, 4
      %s1012 = scalar_lea.vmem %s3, %s1011
      // Predicated region
      $region41: #{tpu_custom_call.1} parent=31 // pred_check
        %p1013 = pneg %p135
      $region42: #{tpu_custom_call.1} parent=31 // pred_check_branch
        %1015 = sbr.rel (%p1013) target = $region44
      $region43: #{tpu_custom_call.1} parent=31 // pred_region
        %s1016 = smul.u32 32, %s19
      $region44: #{tpu_custom_call.1} parent=31 // pred_fallthru
        _
    $region32: #{tpu_custom_call.1} parent=5 // pred_fallthru
      _
    %p1017 = scmp.le.s32.totalorder 2, %s9
    // Predicated region
    $region45: #{tpu_custom_call.1} parent=5 // pred_check
      %p1018 = pneg %p1017
    $region46: #{tpu_custom_call.1} parent=5 // pred_check_branch
      %1020 = sbr.rel (%p1018) target = $region48
    $region47: #{tpu_custom_call.1} parent=5 // pred_region
      %s1021 = ssub.s32 %s9, 2
      // Predicated region
      $region49: #{tpu_custom_call.1} parent=47 // pred_check
        %p1022 = pneg %p141
      $region50: #{tpu_custom_call.1} parent=47 // pred_check_branch
        %1024 = sbr.rel (%p1022) target = $region52
      $region51: #{tpu_custom_call.1} parent=47 // pred_region
        %s1025 = smul.u32 32, %s22
        %p1026 = scmp.lt.s32.totalorder %s1025, 63
        %s1027 = scalar_select %p1026, %s1025, 63
        %p1028 = scmp.lt.s32.totalorder %s23, 0
        %s1029 = scalar_select %p1028, %s23, 0
        %s1030 = sadd.s32 %s1029, %s1027
        %s1031 = smul.addr %s1030, 4
        %s1032 = scalar_lea.vmem %s3, %s1031
      $region52: #{tpu_custom_call.1} parent=47 // pred_fallthru
        _
    $region48: #{tpu_custom_call.1} parent=5 // pred_fallthru
      _
  $region6: #{tpu_custom_call.1} parent=0 // loop_footer
    %s13 = sadd.s32 1, %s9
  $region7: #{tpu_custom_call.1} parent=0 // loop_footer_branch
    %8 = sbr.rel target = $region3
  $region8: #{tpu_custom_call.1} parent=0 // loop_exit
    _

</llo_original>
